<compile_context>
chip_gen: v7x
topology: tpu7x:2x2x1
jax: 0.10.0
libtpu: 0.0.40
codegen_flags: <defaults>
</compile_context>

<pallas_src>
import functools
import math

import jax
import jax.numpy as jnp
from jax.experimental import pallas as pl
from jax.experimental.pallas import tpu as pltpu

# Matcher "parameters" (module __init__ defaults), deterministic constants.
COST_CLASS = 1.0
COST_MASK = 1.0
COST_DICE = 1.0
O_WEIGHT = 1e-4
A_WEIGHT = 1e-3

_LANE = 128
_SUBLANE = 8
_T_SCALE = 127.0          # int8 quantization scale for target point samples


# ----------------------------- kernel -----------------------------

def _cost_kernel(bps, inv_p, t_unscale,
                 logits_ref, onehot_t_ref, x_ref, t_ref, tsum_ref, geo_ref,
                 c_ref,
                 negxt_acc, dice_acc, sp_acc, sig_acc):
    """Grid = (batch_steps, p_steps). Trailing axis is the P reduction.

    Accumulators (VMEM scratch, f32):
      negxt_acc : (bps, Nq, Ntp)  running (-x) @ t
      dice_acc  : (bps, Nq, Ntp)  running (2*sigmoid(x)) @ t
      sp_acc    : (bps, Nq, 1)    running rowsum(softplus(x))
      sig_acc   : (bps, Nq, 1)    running rowsum(sigmoid(x))
    """
    pi = pl.program_id(1)

    @pl.when(pi == 0)
    def _init():
        negxt_acc[...] = jnp.zeros_like(negxt_acc)
        dice_acc[...] = jnp.zeros_like(dice_acc)
        sp_acc[...] = jnp.zeros_like(sp_acc)
        sig_acc[...] = jnp.zeros_like(sig_acc)

    # Local-batch loop as scf.for: bounds live ranges of the f32 temporaries to
    # one batch element (a static Python unroll keeps them all live -> spills).
    @pl.loop(0, bps)
    def _accumulate(bb):
        x = x_ref[bb].astype(jnp.float32)                        # (Nq, Pt) pred mask logits
        # int8 targets (0..127) -> f32 -> bf16; integers <=127 are exact in bf16.
        t = t_ref[bb].astype(jnp.float32).astype(jnp.bfloat16)   # (Pt, Ntp)

        # Shared z = exp(-|x|) feeds both softplus(x) and sigmoid(x).
        z = jnp.exp(-jnp.abs(x))                                 # z in (0, 1]
        inv_1pz = 1.0 / (1.0 + z)                                # exact (correctness)
        softplus_x = jnp.log(1.0 + z) + jnp.maximum(x, 0.0)      # BCE(x, 0) == softplus(x)
        sig = jnp.where(x >= 0.0, inv_1pz, z * inv_1pz)          # sigmoid(x)

        # Two bf16 MXU matmuls sharing RHS t (no in-kernel concatenate copy).
        negxt_acc[bb] = negxt_acc[bb] + jnp.dot(
            (-x).astype(jnp.bfloat16), t, preferred_element_type=jnp.float32)
        dice_acc[bb] = dice_acc[bb] + jnp.dot(
            (2.0 * sig).astype(jnp.bfloat16), t, preferred_element_type=jnp.float32)
        sp_acc[bb] = sp_acc[bb] + jnp.sum(softplus_x, axis=-1, keepdims=True)
        sig_acc[bb] = sig_acc[bb] + jnp.sum(sig, axis=-1, keepdims=True)

    @pl.when(pi == pl.num_programs(1) - 1)
    def _finalize():
        @pl.loop(0, bps)
        def _write(bb):
            # cost_class = -softmax(logits)[:, tgt_ids]  (gather as one-hot matmul)
            logits = logits_ref[bb].astype(jnp.float32)          # (Nq, C)
            m = jnp.max(logits, axis=-1, keepdims=True)
            e = jnp.exp(logits - m)
            prob = e / jnp.sum(e, axis=-1, keepdims=True)        # exact reciprocal
            cost_class = -jnp.dot(prob, onehot_t_ref[bb],
                                  preferred_element_type=jnp.float32)

            neg_x_t = negxt_acc[bb] * t_unscale                  # undo int8 scale
            dice_num = dice_acc[bb] * t_unscale
            t_colsum = tsum_ref[bb]                              # (1, Ntp) exact f32 from host

            # batch_sigmoid_ce_loss, using softplus(-x) - softplus(x) = -x:
            #   (dot(pos, t) + dot(neg, 1-t)) / P == (dot(-x, t) + rowsum(softplus(x))) / P
            cost_mask = (neg_x_t + sp_acc[bb]) * inv_p

            # batch_dice_loss
            cost_dice = 1.0 - (dice_num + 1.0) / (sig_acc[bb] + t_colsum + 1.0)

            c_ref[bb] = (COST_MASK * cost_mask
                         + COST_CLASS * cost_class
                         + COST_DICE * cost_dice
                         + geo_ref[bb].astype(jnp.float32))      # geo = Ow*dtOrigin + Aw*dtAxis


# ----------------------------- wrapper -----------------------------

def _physical_vmem_bytes():
    try:
        return int(pltpu.get_tpu_info().vmem_capacity_bytes)
    except Exception:
        return 64 << 20          # conservative (v7x-sized) fallback


def _pick_tiling(B, Nq, Cp, Ntp, P):
    """Choose the P tile, local-batch fold and vmem limit (generation-aware)."""
    # P tile: multiple of 128 dividing P when possible, else a single full-P step.
    pt = P
    if P % _LANE == 0:
        for cand in (2048, 1024, 512, 256, _LANE):
            if P % cand == 0:
                pt = cand
                break

    phys = _physical_vmem_bytes()
    # 64 MiB parts (v7x) need headroom; 128 MiB parts (v5e/v6e) can fold more batch.
    budget = (16 << 20) if phys <= (64 << 20) else (24 << 20)

    def step_bytes(bps):
        stream = (Nq * Cp * 4         # logits f32
                  + Cp * Ntp * 4      # one-hot f32
                  + Nq * pt * 2       # pred points bf16
                  + pt * Ntp * 1      # target points int8
                  + Ntp * 4           # colsum f32
                  + Nq * Ntp * 2      # geo bf16
                  + Nq * Ntp * 4)     # output f32
        dbuf = 2 * bps * stream                              # double-buffered blocks
        scratch = bps * (2 * Nq * Ntp * 4 + 2 * Nq * 4)      # f32 accumulators
        temps = 6 * Nq * pt * 4 + 4 * Nq * Ntp * 4           # in-flight f32 temporaries (1 bb)
        return dbuf + scratch + temps

    # Keep >= min(B, 4) grid steps: pipelining needs an i+1 step, v7x megacore
    # needs >= 2 parallel steps to shard.
    min_steps = min(B, 4)
    bps = 1
    for cand in range(B, 0, -1):
        if B % cand:
            continue
        if B // cand < min_steps:
            continue
        if step_bytes(cand) <= budget:
            bps = cand
            break

    vmem_limit = int(min(phys - (16 << 20),
                         max(32 << 20, 2 * step_bytes(bps))))
    return pt, bps, vmem_limit


def matcher_cost_pallas(pred_logits, onehot_t, out_mask_pts, tgt_mask_pts_q,
                        tgt_colsum, geo):
    """pred_logits (B,Nq,C) f32; onehot_t (B,C,Ntp) f32; out_mask_pts (B,Nq,P) bf16;
    tgt_mask_pts_q (B,P,Ntp) int8 (x127); tgt_colsum (B,1,Ntp) f32; geo (B,Nq,Ntp) bf16.
    Nq must be a multiple of 8, Ntp a multiple of 128."""
    B, Nq, Cp = pred_logits.shape
    Ntp = onehot_t.shape[-1]
    P = out_mask_pts.shape[-1]
    assert Ntp % _LANE == 0
    assert Nq % _SUBLANE == 0

    pt, bps, vmem_limit = _pick_tiling(B, Nq, Cp, Ntp, P)
    nb_steps = B // bps
    np_steps = P // pt

    kernel = functools.partial(_cost_kernel, bps, 1.0 / P, 1.0 / _T_SCALE)
    out = pl.pallas_call(
        kernel,
        out_shape=jax.ShapeDtypeStruct((B, Nq, Ntp), jnp.float32),
        grid_spec=pltpu.PrefetchScalarGridSpec(
            num_scalar_prefetch=0,
            grid=(nb_steps, np_steps),
            in_specs=[
                pl.BlockSpec((bps, Nq, Cp), lambda b, p: (b, 0, 0)),
                pl.BlockSpec((bps, Cp, Ntp), lambda b, p: (b, 0, 0)),
                pl.BlockSpec((bps, Nq, pt), lambda b, p: (b, 0, p)),
                pl.BlockSpec((bps, pt, Ntp), lambda b, p: (b, p, 0)),
                pl.BlockSpec((bps, 1, Ntp), lambda b, p: (b, 0, 0)),
                pl.BlockSpec((bps, Nq, Ntp), lambda b, p: (b, 0, 0)),
            ],
            out_specs=pl.BlockSpec((bps, Nq, Ntp), lambda b, p: (b, 0, 0)),
            scratch_shapes=[
                pltpu.VMEM((bps, Nq, Ntp), jnp.float32),
                pltpu.VMEM((bps, Nq, Ntp), jnp.float32),
                pltpu.VMEM((bps, Nq, 1), jnp.float32),
                pltpu.VMEM((bps, Nq, 1), jnp.float32),
            ]),
        compiler_params=pltpu.CompilerParams(
            dimension_semantics=("parallel", "arbitrary"),
            vmem_limit_bytes=vmem_limit),
    )(pred_logits, onehot_t, out_mask_pts, tgt_mask_pts_q, tgt_colsum, geo)
    return out


# ----------------------------- glue (plain JAX) -----------------------------

def _pad_axis(x, axis, new_size):
    pad = new_size - x.shape[axis]
    if pad <= 0:
        return x
    cfg = [(0, 0)] * x.ndim
    cfg[axis] = (0, pad)
    return jnp.pad(x, cfg)


def _point_sample(masks, coords):
    """Bilinear point sampling, matching detectron2 point_sample
    (grid_sample, align_corners=False, zeros padding).
    masks: (N, H, W); coords: (P, 2) in [0,1], coords[:,0]=x, coords[:,1]=y."""
    N, H, W = masks.shape
    x = coords[:, 0] * W - 0.5
    y = coords[:, 1] * H - 0.5
    x0 = jnp.floor(x)
    y0 = jnp.floor(y)

    def gather(xi, yi):
        valid = ((xi >= 0) & (xi <= W - 1) & (yi >= 0) & (yi <= H - 1))
        xc = jnp.clip(xi, 0, W - 1).astype(jnp.int32)
        yc = jnp.clip(yi, 0, H - 1).astype(jnp.int32)
        return masks[:, yc, xc] * valid.astype(masks.dtype)[None, :]

    wx1 = x - x0
    wx0 = 1.0 - wx1
    wy1 = y - y0
    wy0 = 1.0 - wy1
    out = (gather(x0, y0) * (wx0 * wy0)[None]
           + gather(x0 + 1.0, y0) * (wx1 * wy0)[None]
           + gather(x0, y0 + 1.0) * (wx0 * wy1)[None]
           + gather(x0 + 1.0, y0 + 1.0) * (wx1 * wy1)[None])
    return out  # (N, P)


def _geometry_costs(pred_origin, gt_origin, pred_axis, gt_axis):
    """dtOrigin / dtAxis terms, per batch element (eps-guarded norms so padded
    zero axis vectors do not produce NaN/inf).
    pred_origin/pred_axis: (Nq,3); gt_origin/gt_axis: (Nt,3)."""
    eps = 1e-12
    shift = pred_origin[:, None, :] - gt_origin[None, :, :]             # (Nq, Nt, 3)
    ga = jnp.broadcast_to(gt_axis[None, :, :], shift.shape)
    cross = jnp.cross(shift, ga)
    cross_norm = jnp.sqrt(jnp.sum(cross * cross, axis=-1))              # (Nq, Nt)
    gt_axis_norm = jnp.sqrt(jnp.sum(gt_axis * gt_axis, axis=-1) + eps)  # (Nt,)
    dt_origin = cross_norm / gt_axis_norm[None, :]                      # diagonal_length = 1

    pred_axis_norm = jnp.sqrt(jnp.sum(pred_axis * pred_axis, axis=-1) + eps)  # (Nq,)
    cos = jnp.sum(gt_axis[None, :, :] * pred_axis[:, None, :], axis=-1) / (
        gt_axis_norm[None, :] * pred_axis_norm[:, None])
    cos = jnp.clip(cos, -1.0, 1.0)
    dt_axis = jnp.arccos(cos) * (180.0 / math.pi)
    return dt_origin, dt_axis


if __name__ == "__main__":
    key = jax.random.PRNGKey(0)
    B, Nq, Nt = 2, 16, 8          # batch, num_queries, num_targets (padded per batch)
    Cp = 9                        # num_classes (+1)
    H = W = 16                    # mask spatial size
    P = 128                       # num_points

    ks = jax.random.split(key, 10)
    pred_logits = jax.random.normal(ks[0], (B, Nq, Cp), jnp.float32)
    pred_masks = jax.random.normal(ks[1], (B, Nq, H, W), jnp.float32)
    tgt_labels = jax.random.randint(ks[2], (B, Nt), 0, Cp)
    tgt_masks = (jax.random.uniform(ks[3], (B, Nt, H, W)) > 0.5).astype(jnp.float32)
    pred_morigins = jax.random.normal(ks[4], (B, Nq, 3), jnp.float32)
    pred_maxises = jax.random.normal(ks[5], (B, Nq, 3), jnp.float32)
    gt_origins = jax.random.normal(ks[6], (B, Nt, 3), jnp.float32)
    gt_axises = jax.random.normal(ks[7], (B, Nt, 3), jnp.float32)
    point_coords = jax.random.uniform(ks[8], (B, P, 2), jnp.float32)

    # Point-sample pred / target masks (same coords within a batch element).
    out_mask_pts = jax.vmap(_point_sample)(pred_masks, point_coords)   # (B, Nq, P)
    tgt_mask_pts = jax.vmap(_point_sample)(tgt_masks, point_coords)    # (B, Nt, P)
    tgt_mask_pts_t = jnp.transpose(tgt_mask_pts, (0, 2, 1))            # (B, P, Nt)

    # One-hot encoding of target labels (class-cost gather as matmul).
    onehot = jax.nn.one_hot(tgt_labels, Cp, dtype=jnp.float32)         # (B, Nt, Cp)
    onehot_t = jnp.transpose(onehot, (0, 2, 1))                        # (B, Cp, Nt)

    # Geometry costs, pre-weighted, folded into a single bf16 input stream.
    dt_origin, dt_axis = jax.vmap(_geometry_costs)(
        pred_morigins, gt_origins, pred_maxises, gt_axises)            # (B, Nq, Nt) each
    geo = (O_WEIGHT * dt_origin + A_WEIGHT * dt_axis).astype(jnp.float32)

    # Lane-dense padding of the Nt axis, sublane-aligned Nq.
    Ntp = max(_LANE, -(-Nt // _LANE) * _LANE)
    Nqp = -(-Nq // _SUBLANE) * _SUBLANE

    pred_logits_p = _pad_axis(pred_logits, 1, Nqp)                     # (B, Nqp, Cp)
    out_pts_p = _pad_axis(out_mask_pts, 1, Nqp).astype(jnp.bfloat16)   # (B, Nqp, P)
    onehot_t_p = _pad_axis(onehot_t, 2, Ntp)                           # (B, Cp, Ntp)

    tgt_p_f32 = _pad_axis(tgt_mask_pts_t, 2, Ntp)                      # (B, P, Ntp) f32
    # int8-quantized targets (x127) halve the dominant DMA stream; exact column
    # sums kept in f32 on the host.
    tgt_q = jnp.rint(jnp.clip(tgt_p_f32, 0.0, 1.0) * _T_SCALE).astype(jnp.int8)
    tgt_colsum = jnp.sum(tgt_p_f32, axis=1, keepdims=True)             # (B, 1, Ntp) f32

    geo_p = _pad_axis(_pad_axis(geo, 2, Ntp), 1, Nqp).astype(jnp.bfloat16)

    C_full = matcher_cost_pallas(
        pred_logits_p, onehot_t_p, out_pts_p, tgt_q, tgt_colsum, geo_p)
    C = jax.block_until_ready(C_full[:, :Nq, :Nt])

    assert C.shape == (B, Nq, Nt)
    assert bool(jnp.all(jnp.isfinite(C)))
    print("KERNEL_OK")
</pallas_src>

<mosaic_0001>
module attributes {stable_mosaic.version = 11 : i64} {
  func.func @_cost_kernel(%arg0: i32, %arg1: i32, %arg2: memref<1x16x9xf32, #tpu.memory_space<vmem>>, %arg3: memref<1x9x128xf32, #tpu.memory_space<vmem>>, %arg4: memref<1x16x128xbf16, #tpu.memory_space<vmem>>, %arg5: memref<1x128x128xi8, #tpu.memory_space<vmem>>, %arg6: memref<1x1x128xf32, #tpu.memory_space<vmem>>, %arg7: memref<1x16x128xbf16, #tpu.memory_space<vmem>>, %arg8: memref<1x16x128xf32, #tpu.memory_space<vmem>>, %arg9: memref<1x16x128xf32, #tpu.memory_space<vmem>>, %arg10: memref<1x16x128xf32, #tpu.memory_space<vmem>>, %arg11: memref<1x16x1xf32, #tpu.memory_space<vmem>>, %arg12: memref<1x16x1xf32, #tpu.memory_space<vmem>>) attributes {dimension_semantics = [#tpu.dimension_semantics<parallel>, #tpu.dimension_semantics<arbitrary>], iteration_bounds = array<i64: 2, 1>, scalar_prefetch = 0 : i64, scratch_operands = 4 : i64, tpu.core_type = #tpu.core_type<tc>, window_params = [{transform_indices = @transform_0, window_bounds = array<i64: 1, 16, 9>}, {transform_indices = @transform_1, window_bounds = array<i64: 1, 9, 128>}, {transform_indices = @transform_2, window_bounds = array<i64: 1, 16, 128>}, {transform_indices = @transform_3, window_bounds = array<i64: 1, 128, 128>}, {transform_indices = @transform_4, window_bounds = array<i64: 1, 1, 128>}, {transform_indices = @transform_5, window_bounds = array<i64: 1, 16, 128>}, {transform_indices = @transform_6, window_bounds = array<i64: 1, 16, 128>}]} {
    %c0_i32 = arith.constant 0 : i32
    %0 = arith.cmpi eq, %arg1, %c0_i32 : i32
    %1 = arith.extui %0 : i1 to i32
    %c0_i32_0 = arith.constant 0 : i32
    %2 = arith.cmpi ne, %1, %c0_i32_0 : i32
    scf.if %2 {
      %cst_36 = arith.constant 0.000000e+00 : f32
      %79 = vector.broadcast %cst_36 : f32 to vector<1x16x128xf32>
      %c0_37 = arith.constant 0 : index
      %c0_38 = arith.constant 0 : index
      %c0_39 = arith.constant 0 : index
      %80 = vector.load %arg9[%c0_37, %c0_38, %c0_39] : memref<1x16x128xf32, #tpu.memory_space<vmem>>, vector<1x16x128xf32>
      tpu.vector_store %arg9[%c0_37, %c0_38, %c0_39], %79 {strides = array<i32>} : memref<1x16x128xf32, #tpu.memory_space<vmem>>, vector<1x16x128xf32>,
      %cst_40 = arith.constant 0.000000e+00 : f32
      %81 = vector.broadcast %cst_40 : f32 to vector<1x16x128xf32>
      %c0_41 = arith.constant 0 : index
      %c0_42 = arith.constant 0 : index
      %c0_43 = arith.constant 0 : index
      %82 = vector.load %arg10[%c0_41, %c0_42, %c0_43] : memref<1x16x128xf32, #tpu.memory_space<vmem>>, vector<1x16x128xf32>
      tpu.vector_store %arg10[%c0_41, %c0_42, %c0_43], %81 {strides = array<i32>} : memref<1x16x128xf32, #tpu.memory_space<vmem>>, vector<1x16x128xf32>,
      %cst_44 = arith.constant 0.000000e+00 : f32
      %83 = vector.broadcast %cst_44 : f32 to vector<1x16x1xf32>
      %c0_45 = arith.constant 0 : index
      %c0_46 = arith.constant 0 : index
      %c0_47 = arith.constant 0 : index
      %84 = vector.load %arg11[%c0_45, %c0_46, %c0_47] : memref<1x16x1xf32, #tpu.memory_space<vmem>>, vector<1x16x1xf32>
      tpu.vector_store %arg11[%c0_45, %c0_46, %c0_47], %83 {strides = array<i32>} : memref<1x16x1xf32, #tpu.memory_space<vmem>>, vector<1x16x1xf32>,
      %cst_48 = arith.constant 0.000000e+00 : f32
      %85 = vector.broadcast %cst_48 : f32 to vector<1x16x1xf32>
      %c0_49 = arith.constant 0 : index
      %c0_50 = arith.constant 0 : index
      %c0_51 = arith.constant 0 : index
      %86 = vector.load %arg12[%c0_49, %c0_50, %c0_51] : memref<1x16x1xf32, #tpu.memory_space<vmem>>, vector<1x16x1xf32>
      tpu.vector_store %arg12[%c0_49, %c0_50, %c0_51], %85 {strides = array<i32>} : memref<1x16x1xf32, #tpu.memory_space<vmem>>, vector<1x16x1xf32>,
    } else {
    }
    %c0_i32_1 = arith.constant 0 : i32
    %c1_i32 = arith.constant 1 : i32
    %3 = arith.muli %c0_i32_1, %c1_i32 : i32
    %c0_i32_2 = arith.constant 0 : i32
    %4 = arith.addi %c0_i32_2, %3 : i32
    %5 = arith.index_cast %4 : i32 to index
    %c0 = arith.constant 0 : index
    %c0_3 = arith.constant 0 : index
    %6 = vector.load %arg4[%5, %c0, %c0_3] : memref<1x16x128xbf16, #tpu.memory_space<vmem>>, vector<1x16x128xbf16>
    %7 = vector.shape_cast %6 : vector<1x16x128xbf16> to vector<16x128xbf16>
    %8 = arith.extf %7 : vector<16x128xbf16> to vector<16x128xf32>
    %9 = arith.index_cast %4 : i32 to index
    %c0_4 = arith.constant 0 : index
    %c0_5 = arith.constant 0 : index
    %10 = vector.load %arg5[%9, %c0_4, %c0_5] : memref<1x128x128xi8, #tpu.memory_space<vmem>>, vector<1x128x128xi8>
    %11 = vector.shape_cast %10 : vector<1x128x128xi8> to vector<128x128xi8>
    %12 = arith.sitofp %11 : vector<128x128xi8> to vector<128x128xf32>
    %13 = arith.truncf %12 : vector<128x128xf32> to vector<128x128xbf16>
    %14 = math.absf %8 : vector<16x128xf32>
    %cst = arith.constant 0.000000e+00 : f32
    %15 = vector.broadcast %cst : f32 to vector<16x128xf32>
    %16 = arith.subf %15, %14 : vector<16x128xf32>
    %17 = math.exp %16 : vector<16x128xf32>
    %cst_6 = arith.constant 1.000000e+00 : f32
    %18 = vector.broadcast %cst_6 : f32 to vector<16x128xf32>
    %19 = arith.addf %18, %17 : vector<16x128xf32>
    %cst_7 = arith.constant 1.000000e+00 : f32
    %20 = vector.broadcast %cst_7 : f32 to vector<16x128xf32>
    %21 = arith.divf %20, %19 : vector<16x128xf32>
    %cst_8 = arith.constant 1.000000e+00 : f32
    %22 = vector.broadcast %cst_8 : f32 to vector<16x128xf32>
    %23 = arith.addf %22, %17 : vector<16x128xf32>
    %24 = math.log %23 : vector<16x128xf32>
    %cst_9 = arith.constant 0.000000e+00 : f32
    %25 = vector.broadcast %cst_9 : f32 to vector<16x128xf32>
    %26 = arith.maximumf %8, %25 : vector<16x128xf32>
    %27 = arith.addf %24, %26 : vector<16x128xf32>
    %cst_10 = arith.constant 0.000000e+00 : f32
    %28 = vector.broadcast %cst_10 : f32 to vector<16x128xf32>
    %29 = arith.cmpf oge, %8, %28 : vector<16x128xf32>
    %30 = arith.mulf %17, %21 : vector<16x128xf32>
    %31 = arith.select %29, %21, %30 : vector<16x128xi1>, vector<16x128xf32>
    %32 = arith.index_cast %4 : i32 to index
    %c0_11 = arith.constant 0 : index
    %c0_12 = arith.constant 0 : index
    %33 = vector.load %arg9[%32, %c0_11, %c0_12] : memref<1x16x128xf32, #tpu.memory_space<vmem>>, vector<1x16x128xf32>
    %34 = vector.shape_cast %33 : vector<1x16x128xf32> to vector<16x128xf32>
    %cst_13 = arith.constant 0.000000e+00 : f32
    %35 = vector.broadcast %cst_13 : f32 to vector<16x128xf32>
    %36 = arith.subf %35, %8 : vector<16x128xf32>
    %37 = arith.truncf %36 : vector<16x128xf32> to vector<16x128xbf16>
    %cst_14 = arith.constant dense<0.000000e+00> : vector<16x128xf32>
    %38 = tpu.matmul %37, %13, %cst_14 {dimension_numbers = #tpu.dot_dimension_numbers<[1], [0], [0], [1], [0, 0, 1, 1], [], []>} : vector<16x128xbf16>, vector<128x128xbf16>, vector<16x128xf32> -> vector<16x128xf32>
    %39 = arith.addf %34, %38 : vector<16x128xf32>
    %40 = arith.index_cast %4 : i32 to index
    %c0_15 = arith.constant 0 : index
    %c0_16 = arith.constant 0 : index
    %41 = vector.load %arg9[%40, %c0_15, %c0_16] : memref<1x16x128xf32, #tpu.memory_space<vmem>>, vector<1x16x128xf32>
    %42 = vector.shape_cast %41 : vector<1x16x128xf32> to vector<16x128xf32>
    %43 = vector.shape_cast %39 : vector<16x128xf32> to vector<1x16x128xf32>
    tpu.vector_store %arg9[%40, %c0_15, %c0_16], %43 {strides = array<i32>} : memref<1x16x128xf32, #tpu.memory_space<vmem>>, vector<1x16x128xf32>,
    %44 = arith.index_cast %4 : i32 to index
    %c0_17 = arith.constant 0 : index
    %c0_18 = arith.constant 0 : index
    %45 = vector.load %arg10[%44, %c0_17, %c0_18] : memref<1x16x128xf32, #tpu.memory_space<vmem>>, vector<1x16x128xf32>
    %46 = vector.shape_cast %45 : vector<1x16x128xf32> to vector<16x128xf32>
    %cst_19 = arith.constant 2.000000e+00 : f32
    %47 = vector.broadcast %cst_19 : f32 to vector<16x128xf32>
    %48 = arith.mulf %47, %31 : vector<16x128xf32>
    %49 = arith.truncf %48 : vector<16x128xf32> to vector<16x128xbf16>
    %cst_20 = arith.constant dense<0.000000e+00> : vector<16x128xf32>
    %50 = tpu.matmul %49, %13, %cst_20 {dimension_numbers = #tpu.dot_dimension_numbers<[1], [0], [0], [1], [0, 0, 1, 1], [], []>} : vector<16x128xbf16>, vector<128x128xbf16>, vector<16x128xf32> -> vector<16x128xf32>
    %51 = arith.addf %46, %50 : vector<16x128xf32>
    %52 = arith.index_cast %4 : i32 to index
    %c0_21 = arith.constant 0 : index
    %c0_22 = arith.constant 0 : index
    %53 = vector.load %arg10[%52, %c0_21, %c0_22] : memref<1x16x128xf32, #tpu.memory_space<vmem>>, vector<1x16x128xf32>
    %54 = vector.shape_cast %53 : vector<1x16x128xf32> to vector<16x128xf32>
    %55 = vector.shape_cast %51 : vector<16x128xf32> to vector<1x16x128xf32>
    tpu.vector_store %arg10[%52, %c0_21, %c0_22], %55 {strides = array<i32>} : memref<1x16x128xf32, #tpu.memory_space<vmem>>, vector<1x16x128xf32>,
    %56 = arith.index_cast %4 : i32 to index
    %c0_23 = arith.constant 0 : index
    %c0_24 = arith.constant 0 : index
    %57 = vector.load %arg11[%56, %c0_23, %c0_24] : memref<1x16x1xf32, #tpu.memory_space<vmem>>, vector<1x16x1xf32>
    %58 = vector.shape_cast %57 : vector<1x16x1xf32> to vector<16x1xf32>
    %cst_25 = arith.constant dense<0.000000e+00> : vector<16xf32>
    %59 = vector.multi_reduction <add>, %27, %cst_25 [1] : vector<16x128xf32> to vector<16xf32>
    %60 = vector.shape_cast %59 : vector<16xf32> to vector<16x1xf32>
    %61 = arith.addf %58, %60 : vector<16x1xf32>
    %62 = arith.index_cast %4 : i32 to index
    %c0_26 = arith.constant 0 : index
    %c0_27 = arith.constant 0 : index
    %63 = vector.load %arg11[%62, %c0_26, %c0_27] : memref<1x16x1xf32, #tpu.memory_space<vmem>>, vector<1x16x1xf32>
    %64 = vector.shape_cast %63 : vector<1x16x1xf32> to vector<16x1xf32>
    %65 = vector.shape_cast %61 : vector<16x1xf32> to vector<1x16x1xf32>
    tpu.vector_store %arg11[%62, %c0_26, %c0_27], %65 {strides = array<i32>} : memref<1x16x1xf32, #tpu.memory_space<vmem>>, vector<1x16x1xf32>,
    %66 = arith.index_cast %4 : i32 to index
    %c0_28 = arith.constant 0 : index
    %c0_29 = arith.constant 0 : index
    %67 = vector.load %arg12[%66, %c0_28, %c0_29] : memref<1x16x1xf32, #tpu.memory_space<vmem>>, vector<1x16x1xf32>
    %68 = vector.shape_cast %67 : vector<1x16x1xf32> to vector<16x1xf32>
    %cst_30 = arith.constant dense<0.000000e+00> : vector<16xf32>
    %69 = vector.multi_reduction <add>, %31, %cst_30 [1] : vector<16x128xf32> to vector<16xf32>
    %70 = vector.shape_cast %69 : vector<16xf32> to vector<16x1xf32>
    %71 = arith.addf %68, %70 : vector<16x1xf32>
    %72 = arith.index_cast %4 : i32 to index
    %c0_31 = arith.constant 0 : index
    %c0_32 = arith.constant 0 : index
    %73 = vector.load %arg12[%72, %c0_31, %c0_32] : memref<1x16x1xf32, #tpu.memory_space<vmem>>, vector<1x16x1xf32>
    %74 = vector.shape_cast %73 : vector<1x16x1xf32> to vector<16x1xf32>
    %75 = vector.shape_cast %71 : vector<16x1xf32> to vector<1x16x1xf32>
    tpu.vector_store %arg12[%72, %c0_31, %c0_32], %75 {strides = array<i32>} : memref<1x16x1xf32, #tpu.memory_space<vmem>>, vector<1x16x1xf32>,
    %c1_i32_33 = arith.constant 1 : i32
    %c0_i32_34 = arith.constant 0 : i32
    %76 = arith.cmpi eq, %arg1, %c0_i32_34 : i32
    %77 = arith.extui %76 : i1 to i32
    %c0_i32_35 = arith.constant 0 : i32
    %78 = arith.cmpi ne, %77, %c0_i32_35 : i32
    scf.if %78 {
      %c0_i32_36 = arith.constant 0 : i32
      %c1_i32_37 = arith.constant 1 : i32
      %79 = arith.muli %c0_i32_36, %c1_i32_37 : i32
      %c0_i32_38 = arith.constant 0 : i32
      %80 = arith.addi %c0_i32_38, %79 : i32
      %81 = arith.index_cast %80 : i32 to index
      %c0_39 = arith.constant 0 : index
      %c0_40 = arith.constant 0 : index
      %82 = vector.load %arg2[%81, %c0_39, %c0_40] : memref<1x16x9xf32, #tpu.memory_space<vmem>>, vector<1x16x9xf32>
      %83 = vector.shape_cast %82 : vector<1x16x9xf32> to vector<16x9xf32>
      %cst_41 = arith.constant dense<0xFF800000> : vector<16xf32>
      %84 = vector.multi_reduction <maximumf>, %83, %cst_41 [1] : vector<16x9xf32> to vector<16xf32>
      %85 = vector.shape_cast %84 : vector<16xf32> to vector<16x1xf32>
      %86 = vector.broadcast %85 : vector<16x1xf32> to vector<16x9xf32>
      %87 = arith.subf %83, %86 : vector<16x9xf32>
      %88 = math.exp %87 : vector<16x9xf32>
      %cst_42 = arith.constant dense<0.000000e+00> : vector<16xf32>
      %89 = vector.multi_reduction <add>, %88, %cst_42 [1] : vector<16x9xf32> to vector<16xf32>
      %90 = vector.shape_cast %89 : vector<16xf32> to vector<16x1xf32>
      %91 = vector.broadcast %90 : vector<16x1xf32> to vector<16x9xf32>
      %92 = arith.divf %88, %91 : vector<16x9xf32>
      %93 = arith.index_cast %80 : i32 to index
      %c0_43 = arith.constant 0 : index
      %c0_44 = arith.constant 0 : index
      %94 = vector.load %arg3[%93, %c0_43, %c0_44] : memref<1x9x128xf32, #tpu.memory_space<vmem>>, vector<1x9x128xf32>
      %95 = vector.shape_cast %94 : vector<1x9x128xf32> to vector<9x128xf32>
      %cst_45 = arith.constant dense<0.000000e+00> : vector<16x128xf32>
      %96 = tpu.matmul %92, %95, %cst_45 {dimension_numbers = #tpu.dot_dimension_numbers<[1], [0], [0], [1], [0, 0, 1, 1], [], []>} : vector<16x9xf32>, vector<9x128xf32>, vector<16x128xf32> -> vector<16x128xf32>
      %cst_46 = arith.constant 0.000000e+00 : f32
      %97 = vector.broadcast %cst_46 : f32 to vector<16x128xf32>
      %98 = arith.subf %97, %96 : vector<16x128xf32>
      %99 = arith.index_cast %80 : i32 to index
      %c0_47 = arith.constant 0 : index
      %c0_48 = arith.constant 0 : index
      %100 = vector.load %arg9[%99, %c0_47, %c0_48] : memref<1x16x128xf32, #tpu.memory_space<vmem>>, vector<1x16x128xf32>
      %101 = vector.shape_cast %100 : vector<1x16x128xf32> to vector<16x128xf32>
      %cst_49 = arith.constant 0.00787401571 : f32
      %102 = vector.broadcast %cst_49 : f32 to vector<16x128xf32>
      %103 = arith.mulf %101, %102 : vector<16x128xf32>
      %104 = arith.index_cast %80 : i32 to index
      %c0_50 = arith.constant 0 : index
      %c0_51 = arith.constant 0 : index
      %105 = vector.load %arg10[%104, %c0_50, %c0_51] : memref<1x16x128xf32, #tpu.memory_space<vmem>>, vector<1x16x128xf32>
      %106 = vector.shape_cast %105 : vector<1x16x128xf32> to vector<16x128xf32>
      %cst_52 = arith.constant 0.00787401571 : f32
      %107 = vector.broadcast %cst_52 : f32 to vector<16x128xf32>
      %108 = arith.mulf %106, %107 : vector<16x128xf32>
      %109 = arith.index_cast %80 : i32 to index
      %c0_53 = arith.constant 0 : index
      %c0_54 = arith.constant 0 : index
      %110 = vector.load %arg6[%109, %c0_53, %c0_54] : memref<1x1x128xf32, #tpu.memory_space<vmem>>, vector<1x1x128xf32>
      %111 = vector.shape_cast %110 : vector<1x1x128xf32> to vector<1x128xf32>
      %112 = arith.index_cast %80 : i32 to index
      %c0_55 = arith.constant 0 : index
      %c0_56 = arith.constant 0 : index
      %113 = vector.load %arg11[%112, %c0_55, %c0_56] : memref<1x16x1xf32, #tpu.memory_space<vmem>>, vector<1x16x1xf32>
      %114 = vector.shape_cast %113 : vector<1x16x1xf32> to vector<16x1xf32>
      %115 = vector.broadcast %114 : vector<16x1xf32> to vector<16x128xf32>
      %116 = arith.addf %103, %115 : vector<16x128xf32>
      %cst_57 = arith.constant 7.812500e-03 : f32
      %117 = vector.broadcast %cst_57 : f32 to vector<16x128xf32>
      %118 = arith.mulf %116, %117 : vector<16x128xf32>
      %cst_58 = arith.constant 1.000000e+00 : f32
      %119 = vector.broadcast %cst_58 : f32 to vector<16x128xf32>
      %120 = arith.addf %108, %119 : vector<16x128xf32>
      %121 = arith.index_cast %80 : i32 to index
      %c0_59 = arith.constant 0 : index
      %c0_60 = arith.constant 0 : index
      %122 = vector.load %arg12[%121, %c0_59, %c0_60] : memref<1x16x1xf32, #tpu.memory_space<vmem>>, vector<1x16x1xf32>
      %123 = vector.shape_cast %122 : vector<1x16x1xf32> to vector<16x1xf32>
      %124 = vector.broadcast %123 : vector<16x1xf32> to vector<16x128xf32>
      %125 = vector.broadcast %111 : vector<1x128xf32> to vector<16x128xf32>
      %126 = arith.addf %124, %125 : vector<16x128xf32>
      %cst_61 = arith.constant 1.000000e+00 : f32
      %127 = vector.broadcast %cst_61 : f32 to vector<16x128xf32>
      %128 = arith.addf %126, %127 : vector<16x128xf32>
      %129 = arith.divf %120, %128 : vector<16x128xf32>
      %cst_62 = arith.constant 1.000000e+00 : f32
      %130 = vector.broadcast %cst_62 : f32 to vector<16x128xf32>
      %131 = arith.subf %130, %129 : vector<16x128xf32>
      %cst_63 = arith.constant 1.000000e+00 : f32
      %132 = vector.broadcast %cst_63 : f32 to vector<16x128xf32>
      %133 = arith.mulf %132, %118 : vector<16x128xf32>
      %cst_64 = arith.constant 1.000000e+00 : f32
      %134 = vector.broadcast %cst_64 : f32 to vector<16x128xf32>
      %135 = arith.mulf %134, %98 : vector<16x128xf32>
      %136 = arith.addf %133, %135 : vector<16x128xf32>
      %cst_65 = arith.constant 1.000000e+00 : f32
      %137 = vector.broadcast %cst_65 : f32 to vector<16x128xf32>
      %138 = arith.mulf %137, %131 : vector<16x128xf32>
      %139 = arith.addf %136, %138 : vector<16x128xf32>
      %140 = arith.index_cast %80 : i32 to index
      %c0_66 = arith.constant 0 : index
      %c0_67 = arith.constant 0 : index
      %141 = vector.load %arg7[%140, %c0_66, %c0_67] : memref<1x16x128xbf16, #tpu.memory_space<vmem>>, vector<1x16x128xbf16>
      %142 = vector.shape_cast %141 : vector<1x16x128xbf16> to vector<16x128xbf16>
      %143 = arith.extf %142 : vector<16x128xbf16> to vector<16x128xf32>
      %144 = arith.addf %139, %143 : vector<16x128xf32>
      %145 = arith.index_cast %80 : i32 to index
      %c0_68 = arith.constant 0 : index
      %c0_69 = arith.constant 0 : index
      %146 = vector.load %arg8[%145, %c0_68, %c0_69] : memref<1x16x128xf32, #tpu.memory_space<vmem>>, vector<1x16x128xf32>
      %147 = vector.shape_cast %146 : vector<1x16x128xf32> to vector<16x128xf32>
      %148 = vector.shape_cast %144 : vector<16x128xf32> to vector<1x16x128xf32>
      tpu.vector_store %arg8[%145, %c0_68, %c0_69], %148 {strides = array<i32>} : memref<1x16x128xf32, #tpu.memory_space<vmem>>, vector<1x16x128xf32>,
      %c1_i32_70 = arith.constant 1 : i32
    } else {
    }
    return
  }
  func.func @transform_0(%arg0: i32, %arg1: i32) -> (i32, i32, i32) {
    %c0_i32 = arith.constant 0 : i32
    %c0_i32_0 = arith.constant 0 : i32
    %c0_i32_1 = arith.constant 0 : i32
    return %arg0, %c0_i32, %c0_i32_0 : i32, i32, i32
  }
  func.func @transform_1(%arg0: i32, %arg1: i32) -> (i32, i32, i32) {
    %c0_i32 = arith.constant 0 : i32
    %c0_i32_0 = arith.constant 0 : i32
    %c0_i32_1 = arith.constant 0 : i32
    return %arg0, %c0_i32, %c0_i32_0 : i32, i32, i32
  }
  func.func @transform_2(%arg0: i32, %arg1: i32) -> (i32, i32, i32) {
    %c0_i32 = arith.constant 0 : i32
    %c0_i32_0 = arith.constant 0 : i32
    return %arg0, %c0_i32, %arg1 : i32, i32, i32
  }
  func.func @transform_3(%arg0: i32, %arg1: i32) -> (i32, i32, i32) {
    %c0_i32 = arith.constant 0 : i32
    %c0_i32_0 = arith.constant 0 : i32
    return %arg0, %arg1, %c0_i32 : i32, i32, i32
  }
  func.func @transform_4(%arg0: i32, %arg1: i32) -> (i32, i32, i32) {
    %c0_i32 = arith.constant 0 : i32
    %c0_i32_0 = arith.constant 0 : i32
    %c0_i32_1 = arith.constant 0 : i32
    return %arg0, %c0_i32, %c0_i32_0 : i32, i32, i32
  }
  func.func @transform_5(%arg0: i32, %arg1: i32) -> (i32, i32, i32) {
    %c0_i32 = arith.constant 0 : i32
    %c0_i32_0 = arith.constant 0 : i32
    %c0_i32_1 = arith.constant 0 : i32
    return %arg0, %c0_i32, %c0_i32_0 : i32, i32, i32
  }
  func.func @transform_6(%arg0: i32, %arg1: i32) -> (i32, i32, i32) {
    %c0_i32 = arith.constant 0 : i32
    %c0_i32_0 = arith.constant 0 : i32
    %c0_i32_1 = arith.constant 0 : i32
    return %arg0, %c0_i32, %c0_i32_0 : i32, i32, i32
  }
}

</mosaic_0001>

<llo_original>
// kernel: tpu_custom_call.1
$region0: #{tpu_custom_call.1}
  #allocation0 [shape = 'u32[]', space=smem, size = 0x4, offset = 0x4, fixed_abs, tag = 'smem constant byte address 0x4 - core index']
  #allocation1 [shape = 'u32[144,128]{1,0:T(1,128)}', space=vmem, size = 0x12000, scoped, tag = 'internal scratch']
  #allocation2 [shape = 'f32[1,16,128]{2,1,0:T(8,128)}', space=vmem, size = 0x2000, scoped, tag = 'scratch operand']
  #allocation3 [shape = 'f32[1,16,128]{2,1,0:T(8,128)}', space=vmem, size = 0x2000, scoped, tag = 'scratch operand']
  #allocation4 [shape = 'f32[1,16,1]{2,1,0:T(8,128)}', space=vmem, size = 0x2000, scoped, tag = 'scratch operand']
  #allocation5 [shape = 'f32[1,16,1]{2,1,0:T(8,128)}', space=vmem, size = 0x2000, scoped, tag = 'scratch operand']
  %s0 = inlined_call_operand.vmem [shape: f32[2,16,9], index: 0, kind: input, shape index: {}]
  %s1 = inlined_call_operand.vmem [shape: f32[2,9,128], index: 1, kind: input, shape index: {}]
  %s2 = inlined_call_operand.vmem [shape: bf16[2,16,128], index: 2, kind: input, shape index: {}]
  %s3 = inlined_call_operand.vmem [shape: s8[2,128,128], index: 3, kind: input, shape index: {}]
  %s4 = inlined_call_operand.vmem [shape: f32[2,1,128], index: 4, kind: input, shape index: {}]
  %s5 = inlined_call_operand.vmem [shape: bf16[2,16,128], index: 5, kind: input, shape index: {}]
  %s6 = inlined_call_operand.hbm [shape: f32[2,16,128], index: 6, kind: output, shape index: {}]
  %s7 = sld [smem:[#allocation0]]
  $region65: #{tpu_custom_call.1} parent=0
    _
  %s9 = ssub.s32 1, %s7
  %s10 = scalar_select 0, %s9, %s7
  $region1: #{tpu_custom_call.1} parent=0
    #allocation6 [shape = 'u8[16384]{0}', space=vmem, size = 0x4000, scoped, tag = 'output window, operand 0']
    #allocation7 [shape = 's32[2]{0}', space=sflag, size = 0x8, scoped, tag = 'scoped memory for tpu_custom_call.1']
    %11 = vsyncpa [#allocation7], 0
    %s12 = scalar_lea.sflag [#allocation7], 1
    %13 = vsyncpa %s12, 0
    loop: start=0, step=1, limit=4
    $region2: #{tpu_custom_call.1} parent=1 // loop_pre_header
      _
    $region3: #{tpu_custom_call.1} parent=1 // loop_header
      %s15 = sphi 0, %s19
      %p16 = scmp.ge.s32.totalorder %s15, 4
      %s22 = sphi 0, %s34
      %s23 = sphi 0, %s30
      %s24 = sphi 0, %s22
      %s25 = sphi 0, %s23
      %s26 = sphi 0, %s24
      %s27 = sphi 0, %s25
      %s37 = sphi 0, %s39
      %s40 = sphi 0, %s37
      %s41 = sphi 0, %s40
      %s57 = sphi 0, %s41
      %s63 = sphi 0, %s65
      %s66 = sphi 0, %s63
      %s67 = sphi 0, %s66
      %s83 = sphi 0, %s67
      %s91 = sphi 0, %s93
      %s94 = sphi 0, %s91
      %s95 = sphi 0, %s94
      %s111 = sphi 0, %s95
      %s119 = sphi 0, %s121
      %s122 = sphi 0, %s119
      %s123 = sphi 0, %s122
      %s139 = sphi 0, %s123
      %s145 = sphi 0, %s147
      %s148 = sphi 0, %s145
      %s149 = sphi 0, %s148
      %s165 = sphi 0, %s149
      %s171 = sphi 0, %s173
      %s174 = sphi 0, %s171
      %s175 = sphi 0, %s174
      %s191 = sphi 0, %s175
      %s197 = sphi 0, %s199
      %s200 = sphi 0, %s197
      %s201 = sphi 0, %s200
      %s217 = sphi 0, %s201
    $region4: #{tpu_custom_call.1} parent=1 // loop_header_branch
      %18 = sbr.rel (%p16) target = $region8
    $region5: #{tpu_custom_call.1} parent=1 // loop_body
      %s20 = ssub.s32 %s15, 1
      %s21 = ssub.s32 %s15, 2
      %s28 = sadd.s32 1, %s23
      %p29 = scmp.ge.s32.totalorder %s28, 1
      %s30 = scalar_select %p29, 0, %s28
      %s31 = sadd.s32 1, %s22
      %s32 = scalar_select %p29, %s31, %s22
      %p33 = scmp.ge.s32.totalorder %s32, 2
      %s34 = scalar_select %p33, 0, %s32
      %s35 = ssub.s32 %s22, %s34
      %p36 = scmp.eq.s32.totalorder %s35, 0
      %s38 = sadd.s32 %s37, 1
      %s39 = scalar_select %p36, %s37, %s38
      %p42 = pneg %p36
      %p43 = scmp.eq.s32.totalorder %s15, 1
      %p44 = por %p42, %p43
      %p45 = scmp.ne.s32.totalorder %s37, %s40
      %p46 = scmp.eq.s32.totalorder %s15, 0
      %p47 = por %p45, %p46
      %p48 = scmp.ne.s32.totalorder %s37, %s40
      %p49 = scmp.eq.s32.totalorder %s20, 1
      %p50 = por %p48, %p49
      %p51 = scmp.ne.s32.totalorder %s40, %s41
      %p52 = scmp.eq.s32.totalorder %s20, 0
      %p53 = por %p51, %p52
      %p54 = scmp.ne.s32.totalorder %s40, %s41
      %p55 = scmp.eq.s32.totalorder %s21, 1
      %p56 = por %p54, %p55
      %p58 = scmp.ne.s32.totalorder %s41, %s57
      %p59 = scmp.eq.s32.totalorder %s21, 0
      %p60 = por %p58, %p59
      %s61 = ssub.s32 %s22, %s34
      %p62 = scmp.eq.s32.totalorder %s61, 0
      %s64 = sadd.s32 %s63, 1
      %s65 = scalar_select %p62, %s63, %s64
      %p68 = pneg %p62
      %p69 = scmp.eq.s32.totalorder %s15, 1
      %p70 = por %p68, %p69
      %p71 = scmp.ne.s32.totalorder %s63, %s66
      %p72 = scmp.eq.s32.totalorder %s15, 0
      %p73 = por %p71, %p72
      %p74 = scmp.ne.s32.totalorder %s63, %s66
      %p75 = scmp.eq.s32.totalorder %s20, 1
      %p76 = por %p74, %p75
      %p77 = scmp.ne.s32.totalorder %s66, %s67
      %p78 = scmp.eq.s32.totalorder %s20, 0
      %p79 = por %p77, %p78
      %p80 = scmp.ne.s32.totalorder %s66, %s67
      %p81 = scmp.eq.s32.totalorder %s21, 1
      %p82 = por %p80, %p81
      %p84 = scmp.ne.s32.totalorder %s67, %s83
      %p85 = scmp.eq.s32.totalorder %s21, 0
      %p86 = por %p84, %p85
      %s87 = ssub.s32 %s22, %s34
      %s88 = ssub.s32 %s23, %s30
      %s89 = sor.u32 %s87, %s88
      %p90 = scmp.eq.s32.totalorder %s89, 0
      %s92 = sadd.s32 %s91, 1
      %s93 = scalar_select %p90, %s91, %s92
      %p96 = pneg %p90
      %p97 = scmp.eq.s32.totalorder %s15, 1
      %p98 = por %p96, %p97
      %p99 = scmp.ne.s32.totalorder %s91, %s94
      %p100 = scmp.eq.s32.totalorder %s15, 0
      %p101 = por %p99, %p100
      %p102 = scmp.ne.s32.totalorder %s91, %s94
      %p103 = scmp.eq.s32.totalorder %s20, 1
      %p104 = por %p102, %p103
      %p105 = scmp.ne.s32.totalorder %s94, %s95
      %p106 = scmp.eq.s32.totalorder %s20, 0
      %p107 = por %p105, %p106
      %p108 = scmp.ne.s32.totalorder %s94, %s95
      %p109 = scmp.eq.s32.totalorder %s21, 1
      %p110 = por %p108, %p109
      %p112 = scmp.ne.s32.totalorder %s95, %s111
      %p113 = scmp.eq.s32.totalorder %s21, 0
      %p114 = por %p112, %p113
      %s115 = ssub.s32 %s22, %s34
      %s116 = ssub.s32 %s23, %s30
      %s117 = sor.u32 %s115, %s116
      %p118 = scmp.eq.s32.totalorder %s117, 0
      %s120 = sadd.s32 %s119, 1
      %s121 = scalar_select %p118, %s119, %s120
      %p124 = pneg %p118
      %p125 = scmp.eq.s32.totalorder %s15, 1
      %p126 = por %p124, %p125
      %p127 = scmp.ne.s32.totalorder %s119, %s122
      %p128 = scmp.eq.s32.totalorder %s15, 0
      %p129 = por %p127, %p128
      %p130 = scmp.ne.s32.totalorder %s119, %s122
      %p131 = scmp.eq.s32.totalorder %s20, 1
      %p132 = por %p130, %p131
      %p133 = scmp.ne.s32.totalorder %s122, %s123
      %p134 = scmp.eq.s32.totalorder %s20, 0
      %p135 = por %p133, %p134
      %p136 = scmp.ne.s32.totalorder %s122, %s123
      %p137 = scmp.eq.s32.totalorder %s21, 1
      %p138 = por %p136, %p137
      %p140 = scmp.ne.s32.totalorder %s123, %s139
      %p141 = scmp.eq.s32.totalorder %s21, 0
      %p142 = por %p140, %p141
      %s143 = ssub.s32 %s22, %s34
      %p144 = scmp.eq.s32.totalorder %s143, 0
      %s146 = sadd.s32 %s145, 1
      %s147 = scalar_select %p144, %s145, %s146
      %p150 = pneg %p144
      %p151 = scmp.eq.s32.totalorder %s15, 1
      %p152 = por %p150, %p151
      %p153 = scmp.ne.s32.totalorder %s145, %s148
      %p154 = scmp.eq.s32.totalorder %s15, 0
      %p155 = por %p153, %p154
      %p156 = scmp.ne.s32.totalorder %s145, %s148
      %p157 = scmp.eq.s32.totalorder %s20, 1
      %p158 = por %p156, %p157
      %p159 = scmp.ne.s32.totalorder %s148, %s149
      %p160 = scmp.eq.s32.totalorder %s20, 0
      %p161 = por %p159, %p160
      %p162 = scmp.ne.s32.totalorder %s148, %s149
      %p163 = scmp.eq.s32.totalorder %s21, 1
      %p164 = por %p162, %p163
      %p166 = scmp.ne.s32.totalorder %s149, %s165
      %p167 = scmp.eq.s32.totalorder %s21, 0
      %p168 = por %p166, %p167
      %s169 = ssub.s32 %s22, %s34
      %p170 = scmp.eq.s32.totalorder %s169, 0
      %s172 = sadd.s32 %s171, 1
      %s173 = scalar_select %p170, %s171, %s172
      %p176 = pneg %p170
      %p177 = scmp.eq.s32.totalorder %s15, 1
      %p178 = por %p176, %p177
      %p179 = scmp.ne.s32.totalorder %s171, %s174
      %p180 = scmp.eq.s32.totalorder %s15, 0
      %p181 = por %p179, %p180
      %p182 = scmp.ne.s32.totalorder %s171, %s174
      %p183 = scmp.eq.s32.totalorder %s20, 1
      %p184 = por %p182, %p183
      %p185 = scmp.ne.s32.totalorder %s174, %s175
      %p186 = scmp.eq.s32.totalorder %s20, 0
      %p187 = por %p185, %p186
      %p188 = scmp.ne.s32.totalorder %s174, %s175
      %p189 = scmp.eq.s32.totalorder %s21, 1
      %p190 = por %p188, %p189
      %p192 = scmp.ne.s32.totalorder %s175, %s191
      %p193 = scmp.eq.s32.totalorder %s21, 0
      %p194 = por %p192, %p193
      %s195 = ssub.s32 %s22, %s34
      %p196 = scmp.eq.s32.totalorder %s195, 0
      %s198 = sadd.s32 %s197, 1
      %s199 = scalar_select %p196, %s197, %s198
      %p202 = pneg %p196
      %p203 = scmp.eq.s32.totalorder %s15, 1
      %p204 = por %p202, %p203
      %p205 = scmp.ne.s32.totalorder %s197, %s200
      %p206 = scmp.eq.s32.totalorder %s15, 0
      %p207 = por %p205, %p206
      %p208 = scmp.ne.s32.totalorder %s197, %s200
      %p209 = scmp.eq.s32.totalorder %s20, 1
      %p210 = por %p208, %p209
      %p211 = scmp.ne.s32.totalorder %s200, %s201
      %p212 = scmp.eq.s32.totalorder %s20, 0
      %p213 = por %p211, %p212
      %p214 = scmp.ne.s32.totalorder %s200, %s201
      %p215 = scmp.eq.s32.totalorder %s21, 1
      %p216 = por %p214, %p215
      %p218 = scmp.ne.s32.totalorder %s201, %s217
      %p219 = scmp.eq.s32.totalorder %s21, 0
      %p220 = por %p218, %p219
      %p221 = scmp.le.s32.totalorder 1, %s15
      %p222 = scmp.lt.s32.totalorder %s15, 3
      %p223 = pnand %p221, %p222
      %p224 = pneg %p223
      // Predicated region
      $region9: #{tpu_custom_call.1} parent=5 // pred_check
        _
      $region10: #{tpu_custom_call.1} parent=5 // pred_check_branch
        %226 = sbr.rel (%p223) target = $region12
      $region11: #{tpu_custom_call.1} parent=5 // pred_region
        %s227 = ssub.s32 %s15, 1
      $region12: #{tpu_custom_call.1} parent=5 // pred_fallthru
        _
      %p228 = scmp.lt.s32.totalorder %s15, 2
      // Predicated region
      $region13: #{tpu_custom_call.1} parent=5 // pred_check
        %p229 = pneg %p228
      $region14: #{tpu_custom_call.1} parent=5 // pred_check_branch
        %231 = sbr.rel (%p229) target = $region16
      $region15: #{tpu_custom_call.1} parent=5 // pred_region
        // Predicated region
        $region17: #{tpu_custom_call.1} parent=15 // pred_check
          %p232 = pneg %p47
        $region18: #{tpu_custom_call.1} parent=15 // pred_check_branch
          %234 = sbr.rel (%p232) target = $region20
        $region19: #{tpu_custom_call.1} parent=15 // pred_region
          %p235 = scmp.lt.s32.totalorder %s22, 1
          %s236 = scalar_select %p235, %s22, 1
          %s237 = smul.addr %s236, 2
          %s238 = smul.addr %s237, 8
          %s239 = scalar_lea.vmem %s0, %s238
        $region20: #{tpu_custom_call.1} parent=15 // pred_fallthru
          _
        // Predicated region
        $region21: #{tpu_custom_call.1} parent=15 // pred_check
          %p240 = pneg %p73
        $region22: #{tpu_custom_call.1} parent=15 // pred_check_branch
          %242 = sbr.rel (%p240) target = $region24
        $region23: #{tpu_custom_call.1} parent=15 // pred_region
          %p243 = scmp.lt.s32.totalorder %s22, 1
          %s244 = scalar_select %p243, %s22, 1
          %s245 = smul.addr %s244, 2
          %s246 = smul.addr %s245, 8
          %s247 = scalar_lea.vmem %s1, %s246
        $region24: #{tpu_custom_call.1} parent=15 // pred_fallthru
          _
        // Predicated region
        $region25: #{tpu_custom_call.1} parent=15 // pred_check
          %p248 = pneg %p101
        $region26: #{tpu_custom_call.1} parent=15 // pred_check_branch
          %250 = sbr.rel (%p248) target = $region28
        $region27: #{tpu_custom_call.1} parent=15 // pred_region
          %p251 = scmp.lt.s32.totalorder %s22, 1
          %s252 = scalar_select %p251, %s22, 1
          %p253 = scmp.lt.s32.totalorder %s23, 0
          %s254 = scalar_select %p253, %s23, 0
          %s255 = smul.addr %s252, 2
          %s256 = sadd.s32 %s254, %s255
          %s257 = smul.addr %s256, 4
          %s258 = scalar_lea.vmem %s2, %s257
        $region28: #{tpu_custom_call.1} parent=15 // pred_fallthru
          _
        // Predicated region
        $region29: #{tpu_custom_call.1} parent=15 // pred_check
          %p259 = pneg %p129
        $region30: #{tpu_custom_call.1} parent=15 // pred_check_branch
          %261 = sbr.rel (%p259) target = $region32
        $region31: #{tpu_custom_call.1} parent=15 // pred_region
          %s262 = smul.u32 4, %s23
          %p263 = scmp.lt.s32.totalorder %s22, 1
          %s264 = scalar_select %p263, %s22, 1
          %p265 = scmp.lt.s32.totalorder %s262, 3
          %s266 = scalar_select %p265, %s262, 3
          %s267 = smul.addr %s264, 4
          %s268 = sadd.s32 %s266, %s267
          %s269 = smul.addr %s268, 8
          %s270 = scalar_lea.vmem %s3, %s269
          %s271 = smul.u32 4, %s23
        $region32: #{tpu_custom_call.1} parent=15 // pred_fallthru
          _
        // Predicated region
        $region33: #{tpu_custom_call.1} parent=15 // pred_check
          %p272 = pneg %p155
        $region34: #{tpu_custom_call.1} parent=15 // pred_check_branch
          %274 = sbr.rel (%p272) target = $region36
        $region35: #{tpu_custom_call.1} parent=15 // pred_region
          %p275 = scmp.lt.s32.totalorder %s22, 1
          %s276 = scalar_select %p275, %s22, 1
          %s277 = scalar_lea.vmem %s4, %s276
        $region36: #{tpu_custom_call.1} parent=15 // pred_fallthru
          _
        // Predicated region
        $region37: #{tpu_custom_call.1} parent=15 // pred_check
          %p278 = pneg %p181
        $region38: #{tpu_custom_call.1} parent=15 // pred_check_branch
          %280 = sbr.rel (%p278) target = $region40
        $region39: #{tpu_custom_call.1} parent=15 // pred_region
          %p281 = scmp.lt.s32.totalorder %s22, 1
          %s282 = scalar_select %p281, %s22, 1
          %s283 = smul.addr %s282, 2
          %s284 = smul.addr %s283, 4
          %s285 = scalar_lea.vmem %s5, %s284
        $region40: #{tpu_custom_call.1} parent=15 // pred_fallthru
          _
      $region16: #{tpu_custom_call.1} parent=5 // pred_fallthru
        _
      %p286 = scmp.le.s32.totalorder 1, %s15
      %p287 = scmp.lt.s32.totalorder %s15, 3
      %p288 = pnand %p286, %p287
      %p289 = pneg %p288
      // Predicated region
      $region41: #{tpu_custom_call.1} parent=5 // pred_check
        _
      $region42: #{tpu_custom_call.1} parent=5 // pred_check_branch
        %291 = sbr.rel (%p288) target = $region44
      $region43: #{tpu_custom_call.1} parent=5 // pred_region
        %s292 = ssub.s32 %s15, 1
        %p293 = scmp.lt.s32.totalorder %s24, 1
        %s294 = scalar_select %p293, %s24, 1
        %s295 = smul.addr %s294, 2
        %s296 = smul.addr %s295, 8
        %s297 = scalar_lea.vmem %s0, %s296
        %p298 = pneg %p53
        %p299 = pneg %p50
        %p300 = scmp.lt.s32.totalorder %s24, 1
        %s301 = scalar_select %p300, %s24, 1
        %s302 = smul.addr %s301, 2
        %s303 = smul.addr %s302, 8
        %s304 = scalar_lea.vmem %s1, %s303
        %p305 = pneg %p79
        %p306 = pneg %p76
        %p307 = scmp.lt.s32.totalorder %s24, 1
        %s308 = scalar_select %p307, %s24, 1
        %p309 = scmp.lt.s32.totalorder %s25, 0
        %s310 = scalar_select %p309, %s25, 0
        %s311 = smul.addr %s308, 2
        %s312 = sadd.s32 %s310, %s311
        %s313 = smul.addr %s312, 4
        %s314 = scalar_lea.vmem %s2, %s313
        %p315 = pneg %p107
        %p316 = pneg %p104
        %s317 = smul.u32 4, %s25
        %p318 = scmp.lt.s32.totalorder %s24, 1
        %s319 = scalar_select %p318, %s24, 1
        %p320 = scmp.lt.s32.totalorder %s317, 3
        %s321 = scalar_select %p320, %s317, 3
        %s322 = smul.addr %s319, 4
        %s323 = sadd.s32 %s321, %s322
        %s324 = smul.addr %s323, 8
        %s325 = scalar_lea.vmem %s3, %s324
        %p326 = pneg %p135
        %p327 = pneg %p132
        %p328 = scmp.lt.s32.totalorder %s24, 1
        %s329 = scalar_select %p328, %s24, 1
        %s330 = scalar_lea.vmem %s4, %s329
        %p331 = pneg %p161
        %p332 = pneg %p158
        %p333 = scmp.lt.s32.totalorder %s24, 1
        %s334 = scalar_select %p333, %s24, 1
        %s335 = smul.addr %s334, 2
        %s336 = smul.addr %s335, 4
        %s337 = scalar_lea.vmem %s5, %s336
        %p338 = pneg %p187
        %p339 = pneg %p184
        %p340 = pneg %p213
        %p341 = pneg %p210
        %s342 = sand.u32 %s200, 1
        %s343 = scalar_lea.sflag [#allocation7], %s342
        %s344 = sand.u32 %s200, 1
        %s345 = smul.addr %s344, 16
        %s346 = scalar_lea.vmem [#allocation6], %s345
        %p347 = scmp.lt.s32.totalorder %s24, 1
        %s348 = scalar_select %p347, %s24, 1
        %s349 = smul.addr %s348, 2
        %s350 = smul.addr %s349, 8
        %s351 = scalar_lea.vmem %s0, %s350
        %p352 = scmp.lt.s32.totalorder %s24, 1
        %s353 = scalar_select %p352, %s24, 1
        %s354 = smul.addr %s353, 2
        %s355 = smul.addr %s354, 8
        %s356 = scalar_lea.vmem %s1, %s355
        %p357 = scmp.lt.s32.totalorder %s24, 1
        %s358 = scalar_select %p357, %s24, 1
        %p359 = scmp.lt.s32.totalorder %s25, 0
        %s360 = scalar_select %p359, %s25, 0
        %s361 = smul.addr %s358, 2
        %s362 = sadd.s32 %s360, %s361
        %s363 = smul.addr %s362, 4
        %s364 = scalar_lea.vmem %s2, %s363
        %s365 = smul.u32 4, %s25
        %p366 = scmp.lt.s32.totalorder %s24, 1
        %s367 = scalar_select %p366, %s24, 1
        %p368 = scmp.lt.s32.totalorder %s365, 3
        %s369 = scalar_select %p368, %s365, 3
        %s370 = smul.addr %s367, 4
        %s371 = sadd.s32 %s369, %s370
        %s372 = smul.addr %s371, 8
        %s373 = scalar_lea.vmem %s3, %s372
        %s374 = smul.u32 4, %s25
        %p375 = scmp.lt.s32.totalorder %s24, 1
        %s376 = scalar_select %p375, %s24, 1
        %s377 = scalar_lea.vmem %s4, %s376
        %p378 = scmp.lt.s32.totalorder %s24, 1
        %s379 = scalar_select %p378, %s24, 1
        %s380 = smul.addr %s379, 2
        %s381 = smul.addr %s380, 4
        %s382 = scalar_lea.vmem %s5, %s381
        %p384 = scmp.eq.s32.totalorder %s25, 0
        // Predicated region
        $region45: #{tpu_custom_call.1} parent=43 // pred_check
          %p385 = pneg %p384
        $region46: #{tpu_custom_call.1} parent=43 // pred_check_branch
          %387 = sbr.rel (%p385) target = $region48
        $region47: #{tpu_custom_call.1} parent=43 // pred_region
          %388 = vst [vmem:[#allocation2] sm:$0xff] 0.0
          %389 = vst [vmem:[#allocation2 + $0x8] sm:$0xff] 0.0
          %390 = vst [vmem:[#allocation3] sm:$0xff] 0.0
          %391 = vst [vmem:[#allocation3 + $0x8] sm:$0xff] 0.0
          %vm392 = vcmask 7168
          %393 = vst.msk [vmem:[#allocation4] sm:$0xff] %vm392, 0.0
          %394 = vst.msk [vmem:[#allocation4 + $0x8] sm:$0xff] %vm392, 0.0
          %395 = vst.msk [vmem:[#allocation5] sm:$0xff] %vm392, 0.0
          %396 = vst.msk [vmem:[#allocation5 + $0x8] sm:$0xff] %vm392, 0.0
        $region48: #{tpu_custom_call.1} parent=43 // pred_fallthru
          _
        %v397 = vld [vmem:[%s364] sm:$0xf]
        %v398 = vld [vmem:[%s364 + $0x4] sm:$0xf]
        %v399 = vunpack.c.l.bf16 %v397
        %v400 = vunpack.c.l.bf16 %v398
        %v401 = vld [vmem:[%s373] sm:$0xff]
        %v402 = vld [vmem:[%s373 + $0x8] sm:$0xff]
        %v403 = vld [vmem:[%s373 + $0x10] sm:$0xff]
        %v404 = vld [vmem:[%s373 + $0x18] sm:$0xff]
        %v405 = vunpack.c.l.s8.bf16 %v401
        %v406 = vunpack.c.h.s8.bf16 %v401
        %v407 = vunpack.c.l.s8.bf16 %v402
        %v408 = vunpack.c.h.s8.bf16 %v402
        %v409 = vunpack.c.l.s8.bf16 %v403
        %v410 = vunpack.c.h.s8.bf16 %v403
        %v411 = vunpack.c.l.s8.bf16 %v404
        %v412 = vunpack.c.h.s8.bf16 %v404
        %v413 = vand.u32 2147483647, %v399
        %v414 = vand.u32 2147483647, %v400
        %v415 = vsub.f32 0.0, %v413
        %v416 = vsub.f32 0.0, %v414
        %v417 = vmul.f32 %v415, 1.442695
        %v418 = vpow.pop %v417
        %v419 = vmul.f32 %v416, 1.442695
        %v420 = vpow.pop %v419
        %v421 = vadd.f32 %v418, 1.0
        %v422 = vadd.f32 %v420, 1.0
        %v423 = vrcp.pop %v421
        %v424 = vmul.f32 1.0, %v423
        %v425 = vrcp.pop %v422
        %v426 = vmul.f32 1.0, %v425
        %v427 = vlog2.pop %v421
        %v428 = vmul.f32 %v427, 0.6931472
        %v429 = vlog2.pop %v422
        %v430 = vmul.f32 %v429, 0.6931472
        %v431 = vmax.f32 %v399, 0.0
        %v432 = vmax.f32 %v400, 0.0
        %v433 = vadd.f32 %v428, %v431
        %v434 = vadd.f32 %v430, %v432
        %vm435 = vcmp.ge.f32.partialorder %v399, 0.0
        %vm436 = vcmp.ge.f32.partialorder %v400, 0.0
        %v437 = vmul.f32 %v418, %v424
        %v438 = vmul.f32 %v420, %v426
        %v439 = vsel %vm435, %v424, %v437
        %v440 = vsel %vm436, %v426, %v438
        %v441 = vld [vmem:[#allocation2] sm:$0xff]
        %v442 = vld [vmem:[#allocation2 + $0x8] sm:$0xff]
        %v443 = vsub.f32 0.0, %v399
        %v444 = vsub.f32 0.0, %v400
        %v445 = vpack.c.bf16 %v444, %v443
        %446 = vmatprep.subr.bf16.mxu0 0
        %447 = vmatpush1.bf16.msra.mxu0 %v405
        %448 = vmatprep.subr.bf16.mxu0 0
        %449 = vmatpush1.bf16.msra.mxu0 %v406
        %450 = vmatprep.subr.bf16.mxu0 0
        %451 = vmatpush1.bf16.msra.mxu0 %v407
        %452 = vmatprep.subr.bf16.mxu0 0
        %453 = vmatpush1.bf16.msra.mxu0 %v408
        %454 = vmatprep.subr.bf16.mxu0 0
        %455 = vmatpush1.bf16.msra.mxu0 %v409
        %456 = vmatprep.subr.bf16.mxu0 0
        %457 = vmatpush1.bf16.msra.mxu0 %v410
        %458 = vmatprep.subr.bf16.mxu0 0
        %459 = vmatpush1.bf16.msra.mxu0 %v411
        %460 = vmatprep.subr.bf16.mxu0 0
        %461 = vmatpush1.bf16.msra.mxu0 %v412
        %462 = vmatprep.subr.bf16.mxu0 0
        %463 = vmatpush1.bf16.msra.mxu0 0
        %464 = vmatprep.subr.bf16.mxu0 0
        %465 = vmatpush1.bf16.msra.mxu0 0
        %466 = vmatprep.subr.bf16.mxu0 0
        %467 = vmatpush1.bf16.msra.mxu0 0
        %468 = vmatprep.subr.bf16.mxu0 0
        %469 = vmatpush1.bf16.msra.mxu0 0
        %470 = vmatprep.subr.bf16.mxu0 0
        %471 = vmatpush1.bf16.msra.mxu0 0
        %472 = vmatprep.subr.bf16.mxu0 0
        %473 = vmatpush1.bf16.msra.mxu0 0
        %474 = vmatprep.subr.bf16.mxu0 0
        %475 = vmatpush1.bf16.msra.mxu0 0
        %476 = vmatprep.subr.bf16.mxu0 0
        %477 = vmatpush1.bf16.msra.mxu0 0
        %478 = vmatprep.mubr.bf16.mxu0 0
        %479 = vmatmul.mubr.bf16.gmra.mrb[0].mxu0 %v445
        %v480 = vpop.f32.mrb[0].mxu0
        %v481 = vadd.f32 0.0, %v480
        %v482 = vpop.f32.mrb[0].mxu0
        %v483 = vpop.f32.mrb[0].mxu0
        %v484 = vadd.f32 0.0, %v483
        %v485 = vpop.f32.mrb[0].mxu0
        %486 = vdwg.mxu0
        %v487 = vadd.f32 %v441, %v481
        %v488 = vadd.f32 %v442, %v484
        %489 = vst [vmem:[#allocation2] sm:$0xff] %v487
        %490 = vst [vmem:[#allocation2 + $0x8] sm:$0xff] %v488
        %v491 = vld [vmem:[#allocation3] sm:$0xff]
        %v492 = vld [vmem:[#allocation3 + $0x8] sm:$0xff]
        %v493 = vmul.f32 %v439, 2.0
        %v494 = vmul.f32 %v440, 2.0
        %v495 = vpack.c.bf16 %v494, %v493
        %496 = vmatprep.subr.bf16.mxu0 0
        %497 = vmatpush1.bf16.msra.mxu0 %v405
        %498 = vmatprep.subr.bf16.mxu0 0
        %499 = vmatpush1.bf16.msra.mxu0 %v406
        %500 = vmatprep.subr.bf16.mxu0 0
        %501 = vmatpush1.bf16.msra.mxu0 %v407
        %502 = vmatprep.subr.bf16.mxu0 0
        %503 = vmatpush1.bf16.msra.mxu0 %v408
        %504 = vmatprep.subr.bf16.mxu0 0
        %505 = vmatpush1.bf16.msra.mxu0 %v409
        %506 = vmatprep.subr.bf16.mxu0 0
        %507 = vmatpush1.bf16.msra.mxu0 %v410
        %508 = vmatprep.subr.bf16.mxu0 0
        %509 = vmatpush1.bf16.msra.mxu0 %v411
        %510 = vmatprep.subr.bf16.mxu0 0
        %511 = vmatpush1.bf16.msra.mxu0 %v412
        %512 = vmatprep.subr.bf16.mxu0 0
        %513 = vmatpush1.bf16.msra.mxu0 0
        %514 = vmatprep.subr.bf16.mxu0 0
        %515 = vmatpush1.bf16.msra.mxu0 0
        %516 = vmatprep.subr.bf16.mxu0 0
        %517 = vmatpush1.bf16.msra.mxu0 0
        %518 = vmatprep.subr.bf16.mxu0 0
        %519 = vmatpush1.bf16.msra.mxu0 0
        %520 = vmatprep.subr.bf16.mxu0 0
        %521 = vmatpush1.bf16.msra.mxu0 0
        %522 = vmatprep.subr.bf16.mxu0 0
        %523 = vmatpush1.bf16.msra.mxu0 0
        %524 = vmatprep.subr.bf16.mxu0 0
        %525 = vmatpush1.bf16.msra.mxu0 0
        %526 = vmatprep.subr.bf16.mxu0 0
        %527 = vmatpush1.bf16.msra.mxu0 0
        %528 = vmatprep.mubr.bf16.mxu0 0
        %529 = vmatmul.mubr.bf16.gmra.mrb[0].mxu0 %v495
        %v530 = vpop.f32.mrb[0].mxu0
        %v531 = vadd.f32 0.0, %v530
        %v532 = vpop.f32.mrb[0].mxu0
        %v533 = vpop.f32.mrb[0].mxu0
        %v534 = vadd.f32 0.0, %v533
        %v535 = vpop.f32.mrb[0].mxu0
        %536 = vdwg.mxu0
        %v537 = vadd.f32 %v491, %v531
        %v538 = vadd.f32 %v492, %v534
        %539 = vst [vmem:[#allocation3] sm:$0xff] %v537
        %540 = vst [vmem:[#allocation3 + $0x8] sm:$0xff] %v538
        %v541 = vld [vmem:[#allocation4] sm:$0xff]
        %v542 = vld [vmem:[#allocation4 + $0x8] sm:$0xff]
        %543 = vadd.xlane.f32.xlu0 %v433
        %v544 = vpop.xlane.xlu0 %543
        %545 = vadd.xlane.f32.xlu0 %v434
        %v546 = vpop.xlane.xlu0 %545
        %v547 = vadd.f32 %v541, %v544
        %v548 = vadd.f32 %v542, %v546
        %vm549 = vcmask 7168
        %550 = vst.msk [vmem:[#allocation4] sm:$0xff] %vm549, %v547
        %551 = vst.msk [vmem:[#allocation4 + $0x8] sm:$0xff] %vm549, %v548
        %v552 = vld [vmem:[#allocation5] sm:$0xff]
        %v553 = vld [vmem:[#allocation5 + $0x8] sm:$0xff]
        %554 = vadd.xlane.f32.xlu0 %v439
        %v555 = vpop.xlane.xlu0 %554
        %556 = vadd.xlane.f32.xlu0 %v440
        %v557 = vpop.xlane.xlu0 %556
        %v558 = vadd.f32 %v552, %v555
        %v559 = vadd.f32 %v553, %v557
        %560 = vst.msk [vmem:[#allocation5] sm:$0xff] %vm549, %v558
        %561 = vst.msk [vmem:[#allocation5 + $0x8] sm:$0xff] %vm549, %v559
        // Predicated region
        $region49: #{tpu_custom_call.1} parent=43 // pred_check
          %p562 = pneg %p384
        $region50: #{tpu_custom_call.1} parent=43 // pred_check_branch
          %564 = sbr.rel (%p562) target = $region52
        $region51: #{tpu_custom_call.1} parent=43 // pred_region
          %v565 = vld [vmem:[%s351] sm:$0xff]
          %v566 = vld [vmem:[%s351 + $0x8] sm:$0xff]
          %vm567 = vcmask 72704
          %v568 = vsel %vm567, %v565, -inf
          %569 = vmax.xlane.f32.xlu0 %v568
          %v570 = vpop.xlane.xlu0 %569
          %v571 = vsel %vm567, %v566, -inf
          %572 = vmax.xlane.f32.xlu0 %v571
          %v573 = vpop.xlane.xlu0 %572
          %v574 = vsub.f32 %v565, %v570
          %v575 = vsub.f32 %v566, %v573
          %v576 = vmul.f32 %v574, 1.442695
          %v577 = vpow.pop %v576
          %v578 = vmul.f32 %v575, 1.442695
          %v579 = vpow.pop %v578
          %v580 = vsel %vm567, %v577, 0.0
          %581 = vadd.xlane.f32.xlu0 %v580
          %v582 = vpop.xlane.xlu0 %581
          %v583 = vsel %vm567, %v579, 0.0
          %584 = vadd.xlane.f32.xlu0 %v583
          %v585 = vpop.xlane.xlu0 %584
          %v586 = vrcp.pop %v582
          %v587 = vmul.f32 %v577, %v586
          %v588 = vrcp.pop %v585
          %v589 = vmul.f32 %v579, %v588
          %v590 = vld [vmem:[%s356] sm:$0xff]
          %v591 = vld [vmem:[%s356 + $0x8] sm:$0x1]
          %v593 = vsel %vm567, %v587, 0
          %v596 = vsel %vm567, %v589, 0
          %vm598 = vcmask 1040384
          %v600 = vsel %vm598, %v591, 0
          %602 = vmatprep.subr.mxu0 0.0
          %603 = vmatpush1.msra.mxu0 %v590
          %604 = vmatprep.subr.mxu0 0.0
          %605 = vmatpush1.msra.mxu0 %v600
          %606 = vmatprep.subr.mxu0 0.0
          %607 = vmatpush1.msra.mxu0 0.0
          %608 = vmatprep.subr.mxu0 0.0
          %609 = vmatpush1.msra.mxu0 0.0
          %610 = vmatprep.subr.mxu0 0.0
          %611 = vmatpush1.msra.mxu0 0.0
          %612 = vmatprep.subr.mxu0 0.0
          %613 = vmatpush1.msra.mxu0 0.0
          %614 = vmatprep.subr.mxu0 0.0
          %615 = vmatpush1.msra.mxu0 0.0
          %616 = vmatprep.subr.mxu0 0.0
          %617 = vmatpush1.msra.mxu0 0.0
          %618 = vmatprep.subr.mxu0 0.0
          %619 = vmatpush1.msra.mxu0 0.0
          %620 = vmatprep.subr.mxu0 0.0
          %621 = vmatpush1.msra.mxu0 0.0
          %622 = vmatprep.subr.mxu0 0.0
          %623 = vmatpush1.msra.mxu0 0.0
          %624 = vmatprep.subr.mxu0 0.0
          %625 = vmatpush1.msra.mxu0 0.0
          %626 = vmatprep.subr.mxu0 0.0
          %627 = vmatpush1.msra.mxu0 0.0
          %628 = vmatprep.subr.mxu0 0.0
          %629 = vmatpush1.msra.mxu0 0.0
          %630 = vmatprep.subr.mxu0 0.0
          %631 = vmatpush1.msra.mxu0 0.0
          %632 = vmatprep.subr.mxu0 0.0
          %633 = vmatpush1.msra.mxu0 0.0
          %634 = vmatprep.subr.mxu0 0.0
          %635 = vmatpush1.msra.mxu0 0.0
          %636 = vmatprep.subr.mxu0 0.0
          %637 = vmatpush1.msra.mxu0 0.0
          %638 = vmatprep.subr.mxu0 0.0
          %639 = vmatpush1.msra.mxu0 0.0
          %640 = vmatprep.subr.mxu0 0.0
          %641 = vmatpush1.msra.mxu0 0.0
          %642 = vmatprep.subr.mxu0 0.0
          %643 = vmatpush1.msra.mxu0 0.0
          %644 = vmatprep.subr.mxu0 0.0
          %645 = vmatpush1.msra.mxu0 0.0
          %646 = vmatprep.subr.mxu0 0.0
          %647 = vmatpush1.msra.mxu0 0.0
          %648 = vmatprep.subr.mxu0 0.0
          %649 = vmatpush1.msra.mxu0 0.0
          %650 = vmatprep.subr.mxu0 0.0
          %651 = vmatpush1.msra.mxu0 0.0
          %652 = vmatprep.subr.mxu0 0.0
          %653 = vmatpush1.msra.mxu0 0.0
          %654 = vmatprep.subr.mxu0 0.0
          %655 = vmatpush1.msra.mxu0 0.0
          %656 = vmatprep.subr.mxu0 0.0
          %657 = vmatpush1.msra.mxu0 0.0
          %658 = vmatprep.subr.mxu0 0.0
          %659 = vmatpush1.msra.mxu0 0.0
          %660 = vmatprep.subr.mxu0 0.0
          %661 = vmatpush1.msra.mxu0 0.0
          %662 = vmatprep.subr.mxu0 0.0
          %663 = vmatpush1.msra.mxu0 0.0
          %664 = vmatprep.subr.mxu0 0.0
          %665 = vmatpush1.msra.mxu0 0.0
          %666 = vmatprep.mubr.f32.mxu0 0.0
          %667 = vmatmul.mubr.f32.gmra.mrb[0].mxu0 %v593
          %v668 = vpop.f32.mrb[0].mxu0
          %v669 = vadd.f32 0.0, %v668
          %v670 = vpop.f32.mrb[0].mxu0
          %671 = vmatprep.mubr.f32.mxu0 0.0
          %672 = vmatmul.mubr.f32.gmra.mrb[0].mxu0 %v596
          %v673 = vpop.f32.mrb[0].mxu0
          %v674 = vadd.f32 0.0, %v673
          %v675 = vpop.f32.mrb[0].mxu0
          %676 = vdwg.mxu0
          %v677 = vsub.f32 0.0, %v669
          %v678 = vsub.f32 0.0, %v674
          %v679 = vld [vmem:[#allocation2] sm:$0xff]
          %v680 = vld [vmem:[#allocation2 + $0x8] sm:$0xff]
          %v681 = vmul.f32 %v679, 0.007874016
          %v682 = vmul.f32 %v680, 0.007874016
          %v683 = vld [vmem:[#allocation3] sm:$0xff]
          %v684 = vld [vmem:[#allocation3 + $0x8] sm:$0xff]
          %v685 = vmul.f32 %v683, 0.007874016
          %v686 = vmul.f32 %v684, 0.007874016
          %v687 = vld [vmem:[%s377] sm:$0x1]
          %v688 = vld [vmem:[#allocation4] sm:$0xff]
          %v689 = vld [vmem:[#allocation4 + $0x8] sm:$0xff]
          %691 = vset.pattern.permute.xlu0 0
          %692 = vperm.xlu0 %691, %v688
          %v693 = vpop.permute.xlu0 %692
          %696 = vset.pattern.permute.xlu0 0
          %697 = vperm.xlu0 %696, %v689
          %v698 = vpop.permute.xlu0 %697
          %v700 = vadd.f32 %v681, %v693
          %v701 = vadd.f32 %v682, %v698
          %v702 = vmul.f32 %v700, 0.0078125
          %v703 = vmul.f32 %v701, 0.0078125
          %v704 = vadd.f32 %v685, 1.0
          %v705 = vadd.f32 %v686, 1.0
          %v706 = vld [vmem:[#allocation5] sm:$0xff]
          %v707 = vld [vmem:[#allocation5 + $0x8] sm:$0xff]
          %709 = vset.pattern.permute.xlu0 0
          %710 = vperm.xlu0 %709, %v706
          %v711 = vpop.permute.xlu0 %710
          %714 = vset.pattern.permute.xlu0 0
          %715 = vperm.xlu0 %714, %v707
          %v716 = vpop.permute.xlu0 %715
          %v719 = vlaneseq
          %v720 = vshrl.u32 %v719, 7
          %v721 = vsub.s32 0, %v720
          %v722 = vrot.slane %v687, %v721
          %v724 = vadd.f32 %v711, %v722
          %v725 = vadd.f32 %v716, %v722
          %v726 = vadd.f32 %v724, 1.0
          %v727 = vadd.f32 %v725, 1.0
          %v728 = vrcp.pop %v726
          %v729 = vmul.f32 %v704, %v728
          %v730 = vrcp.pop %v727
          %v731 = vmul.f32 %v705, %v730
          %v732 = vsub.f32 1.0, %v729
          %v733 = vsub.f32 1.0, %v731
          %v734 = vadd.f32 %v702, %v677
          %v735 = vadd.f32 %v703, %v678
          %v736 = vadd.f32 %v734, %v732
          %v737 = vadd.f32 %v735, %v733
          %v738 = vld [vmem:[%s382] sm:$0xf]
          %v739 = vld [vmem:[%s382 + $0x4] sm:$0xf]
          %v740 = vunpack.c.l.bf16 %v738
          %v741 = vunpack.c.l.bf16 %v739
          %v742 = vadd.f32 %v736, %v740
          %v743 = vadd.f32 %v737, %v741
          %744 = vst [vmem:[%s346] sm:$0xff] %v742
          %745 = vst [vmem:[%s346 + $0x8] sm:$0xff] %v743
        $region52: #{tpu_custom_call.1} parent=43 // pred_fallthru
          _
        %s746 = sand.u32 %s200, 1
        %s747 = scalar_lea.sflag [#allocation7], %s746
        %s748 = sand.u32 %s200, 1
        %s749 = smul.addr %s748, 16
        %s750 = scalar_lea.vmem [#allocation6], %s749
        // Predicated region
        $region53: #{tpu_custom_call.1} parent=43 // pred_check
          %p751 = pneg %p210
        $region54: #{tpu_custom_call.1} parent=43 // pred_check_branch
          %753 = sbr.rel (%p751) target = $region56
        $region55: #{tpu_custom_call.1} parent=43 // pred_region
          %s755 = ssub.s32 256, 256
          %756 = vsyncadd %s747, %s755
          %s757 = smul.addr %s24, 2
          %s758 = smul.addr %s757, 128
          %s759 = scalar_lea.hbm %s6, %s758
          %s760 = sshll.u32 %s750, 4
          %s761 = int_to_ptr.vmem [resolvable:$true] %s760
          %766 = dma.vmem_to_hbm [thread:$0]  %s761, 256, %s759, %s747, 128, 128, 8
        $region56: #{tpu_custom_call.1} parent=43 // pred_fallthru
          _
      $region44: #{tpu_custom_call.1} parent=5 // pred_fallthru
        _
      %p767 = scmp.le.s32.totalorder 2, %s15
      // Predicated region
      $region57: #{tpu_custom_call.1} parent=5 // pred_check
        %p768 = pneg %p767
      $region58: #{tpu_custom_call.1} parent=5 // pred_check_branch
        %770 = sbr.rel (%p768) target = $region60
      $region59: #{tpu_custom_call.1} parent=5 // pred_region
        %s771 = ssub.s32 %s15, 2
        // Predicated region
        $region61: #{tpu_custom_call.1} parent=59 // pred_check
          %p772 = pneg %p216
        $region62: #{tpu_custom_call.1} parent=59 // pred_check_branch
          %774 = sbr.rel (%p772) target = $region64
        $region63: #{tpu_custom_call.1} parent=59 // pred_region
          %s775 = sand.u32 %s201, 1
          %s776 = scalar_lea.sflag [#allocation7], %s775
          %s777 = sand.u32 %s201, 1
          %s778 = smul.addr %s777, 16
          %s779 = scalar_lea.vmem [#allocation6], %s778
          %780 = dma.done %s776, 256
        $region64: #{tpu_custom_call.1} parent=59 // pred_fallthru
          _
      $region60: #{tpu_custom_call.1} parent=5 // pred_fallthru
        _
    $region6: #{tpu_custom_call.1} parent=1 // loop_footer
      %s19 = sadd.s32 1, %s15
    $region7: #{tpu_custom_call.1} parent=1 // loop_footer_branch
      %14 = sbr.rel target = $region3
    $region8: #{tpu_custom_call.1} parent=1 // loop_exit
      _
    %781 = vsyncpa [#allocation7], 1
    %s782 = scalar_lea.sflag [#allocation7], 1
    %783 = vsyncpa %s782, 1

</llo_original>
